<compile_context>
chip_gen: v5e
topology: v5e:2x2
jax: 0.10.0
libtpu: 0.0.40
codegen_flags: <defaults>
</compile_context>

<pallas_src>
import functools

import jax
import jax.numpy as jnp
from jax.experimental import pallas as pl
from jax.experimental.pallas import tpu as pltpu


def _rmsnorm_kernel(x_ref, w_ref, o_ref, *, eps):
    # x_ref: (tm, hidden) input dtype; w_ref: (1, hidden) weight dtype;
    # o_ref: (tm, hidden) promoted output dtype.
    # Reduction pass in f32.
    x32 = x_ref[...].astype(jnp.float32)
    var = jnp.mean(x32 * x32, axis=-1, keepdims=True)      # mean(x^2) over hidden
    inv = jax.lax.rsqrt(var + eps)
    # HF semantics: cast the normalized activations back to the input dtype
    # BEFORE the weight multiply; dtype promotion with the weight then gives
    # the output dtype.  x_ref is re-read here (already resident in VMEM) so
    # the f32 upcast above does not need to stay live across the reduction,
    # keeping at most one full-block f32 temporary.
    normed = (x_ref[...].astype(jnp.float32) * inv).astype(x_ref.dtype)
    o_ref[...] = (w_ref[...] * normed).astype(o_ref.dtype)


def _round_up(a: int, b: int) -> int:
    return ((a + b - 1) // b) * b


def _cdiv(a: int, b: int) -> int:
    return (a + b - 1) // b


def _vmem_capacity_bytes() -> int:
    try:
        return int(pltpu.get_tpu_info().vmem_capacity_bytes)
    except Exception:
        return 64 << 20                      # conservative default (v7x per-TC VMEM)


def _pick_row_tile(rows: int, hidden: int, in_itemsize: int,
                   out_itemsize: int, vmem_capacity: int) -> int:
    """Row tile from the TOTAL per-step footprint, multiple of the sublane pack."""
    pack = {1: 32, 2: 16, 4: 8}.get(in_itemsize, 8)         # int8/fp8, bf16, f32
    # Resident bytes per row per pipeline step:
    #   2x double-buffered input + 2x double-buffered output + ~1.5 f32 temps.
    per_row = hidden * (2 * in_itemsize + 2 * out_itemsize + 6)
    budget = min(int(0.55 * vmem_capacity), 72 << 20)        # ~35 MiB on v7x, ~70 MiB on v5e/v6e
    tm_cap = 2048 if vmem_capacity >= (96 << 20) else 1024   # fatter tiles on 128 MiB parts
    tm = max(pack, min(tm_cap, budget // max(per_row, 1)) // pack * pack)
    rows_up = _round_up(rows, pack)
    tm = min(tm, rows_up)
    # Keep the 1-D "parallel" grid deep enough for v7x megacore + pipelining,
    # but never shrink a step below ~2 MiB of combined in+out traffic.
    min_steps = min(16, _cdiv(rows_up, pack))
    step_floor = 2 << 20
    while (tm > pack and _cdiv(rows, tm) < min_steps
           and (tm // 2) * hidden * (in_itemsize + out_itemsize) >= step_floor):
        tm = max(pack, (tm // 2) // pack * pack)
    return tm


def llama_rmsnorm(hidden_states: jax.Array, weight: jax.Array,
                  eps: float = 1e-6, row_tile: int | None = None,
                  out_dtype=None) -> jax.Array:
    """RMSNorm over the last axis, matching LlamaRMSNorm.forward semantics."""
    orig_shape = hidden_states.shape
    hidden = orig_shape[-1]
    x2d = hidden_states.reshape(-1, hidden)
    rows = x2d.shape[0]

    in_dtype = x2d.dtype
    if out_dtype is None:
        out_dtype = jnp.result_type(weight.dtype, in_dtype)  # PyTorch promotion
    in_itemsize = jnp.dtype(in_dtype).itemsize
    out_itemsize = jnp.dtype(out_dtype).itemsize

    vmem_capacity = _vmem_capacity_bytes()
    tm = row_tile if row_tile is not None else _pick_row_tile(
        rows, hidden, in_itemsize, out_itemsize, vmem_capacity)

    w2d = weight.reshape(1, hidden)
    grid = (_cdiv(rows, tm),)   # partial last block: reads padded, writes masked

    # VMEM limit sized to the real footprint: 2x double-buffered input block +
    # 2x double-buffered output block + ~2 full-block f32 temporaries + resident
    # weight + headroom, capped under the chip's physical VMEM.
    block_in = tm * hidden * in_itemsize
    block_out = tm * hidden * out_itemsize
    f32_tmp = tm * hidden * 4
    w_bytes = hidden * jnp.dtype(weight.dtype).itemsize
    need = 2 * (block_in + block_out) + 2 * f32_tmp + 2 * w_bytes + (2 << 20)
    vmem_limit = int(min(max(need, 32 << 20), int(0.85 * vmem_capacity)))

    out = pl.pallas_call(
        functools.partial(_rmsnorm_kernel, eps=eps),
        out_shape=jax.ShapeDtypeStruct((rows, hidden), out_dtype),
        grid_spec=pl.GridSpec(
            grid=grid,
            in_specs=[
                pl.BlockSpec((tm, hidden), lambda i: (i, 0)),
                pl.BlockSpec((1, hidden), lambda i: (0, 0)),   # weight resident
            ],
            out_specs=pl.BlockSpec((tm, hidden), lambda i: (i, 0)),
        ),
        compiler_params=pltpu.CompilerParams(
            dimension_semantics=("parallel",),
            vmem_limit_bytes=vmem_limit,
        ),
    )(x2d, w2d)

    return out.reshape(orig_shape[:-1] + (hidden,))


def _reference_rmsnorm(hidden_states, weight, eps=1e-6):
    input_dtype = hidden_states.dtype
    x = hidden_states.astype(jnp.float32)
    variance = jnp.mean(x * x, axis=-1, keepdims=True)
    x = x * jax.lax.rsqrt(variance + eps)
    return weight * x.astype(input_dtype)


if __name__ == "__main__":
    key = jax.random.PRNGKey(0)

    # --- Test 1: f32 activations / f32 weight, small Llama-68m-like shape ---
    batch, seq, hidden = 2, 8, 32
    weight = jnp.ones((hidden,), dtype=jnp.float32)  # LlamaRMSNorm init: ones
    x = jax.random.normal(key, (batch, seq, hidden), dtype=jnp.float32)

    out = jax.block_until_ready(llama_rmsnorm(x, weight, eps=1e-6))
    ref = _reference_rmsnorm(x, weight, eps=1e-6)
    assert out.shape == x.shape
    assert out.dtype == jnp.result_type(weight.dtype, x.dtype)
    assert jnp.allclose(out, ref, atol=1e-5, rtol=1e-5)

    # --- Test 2: bf16 activations / f32 weight, ragged rows (partial-block path) ---
    k2 = jax.random.PRNGKey(0)
    b2, s2, h2 = 1, 13, 128
    w2 = jnp.ones((h2,), dtype=jnp.float32)
    x2 = jax.random.normal(k2, (b2, s2, h2), dtype=jnp.float32).astype(jnp.bfloat16)

    out2 = jax.block_until_ready(llama_rmsnorm(x2, w2, eps=1e-6))
    ref2 = _reference_rmsnorm(x2, w2, eps=1e-6)
    assert out2.shape == x2.shape
    assert out2.dtype == jnp.float32  # PyTorch promotion: f32 weight * bf16 -> f32
    assert jnp.allclose(out2.astype(jnp.float32), ref2.astype(jnp.float32),
                        atol=1e-2, rtol=1e-2)

    print("KERNEL_OK")
</pallas_src>

<mosaic_0001>
module attributes {stable_mosaic.version = 11 : i64} {
  func.func @_rmsnorm_kernel(%arg0: i32, %arg1: memref<16x32xf32, #tpu.memory_space<vmem>>, %arg2: memref<1x32xf32, #tpu.memory_space<vmem>>, %arg3: memref<16x32xf32, #tpu.memory_space<vmem>>) attributes {dimension_semantics = [#tpu.dimension_semantics<parallel>], iteration_bounds = array<i64: 1>, scalar_prefetch = 0 : i64, scratch_operands = 0 : i64, tpu.core_type = #tpu.core_type<tc>, window_params = [{transform_indices = @transform_0, window_bounds = array<i64: 16, 32>}, {pipeline_mode = #tpu.pipeline_mode<synchronous>, transform_indices = @transform_1, window_bounds = array<i64: 1, 32>}, {transform_indices = @transform_2, window_bounds = array<i64: 16, 32>}]} {
    %c0 = arith.constant 0 : index
    %c0_0 = arith.constant 0 : index
    %0 = vector.load %arg1[%c0, %c0_0] : memref<16x32xf32, #tpu.memory_space<vmem>>, vector<16x32xf32>
    %1 = arith.mulf %0, %0 : vector<16x32xf32>
    %cst = arith.constant dense<0.000000e+00> : vector<16xf32>
    %2 = vector.multi_reduction <add>, %1, %cst [1] : vector<16x32xf32> to vector<16xf32>
    %3 = vector.shape_cast %2 : vector<16xf32> to vector<16x1xf32>
    %cst_1 = arith.constant 3.200000e+01 : f32
    %4 = vector.broadcast %cst_1 : f32 to vector<16x1xf32>
    %5 = arith.divf %3, %4 : vector<16x1xf32>
    %cst_2 = arith.constant 9.99999997E-7 : f32
    %6 = vector.broadcast %cst_2 : f32 to vector<16x1xf32>
    %7 = arith.addf %5, %6 : vector<16x1xf32>
    %8 = math.rsqrt %7 : vector<16x1xf32>
    %c0_3 = arith.constant 0 : index
    %c0_4 = arith.constant 0 : index
    %9 = vector.load %arg1[%c0_3, %c0_4] : memref<16x32xf32, #tpu.memory_space<vmem>>, vector<16x32xf32>
    %10 = vector.broadcast %8 : vector<16x1xf32> to vector<16x32xf32>
    %11 = arith.mulf %9, %10 : vector<16x32xf32>
    %c0_5 = arith.constant 0 : index
    %c0_6 = arith.constant 0 : index
    %12 = vector.load %arg2[%c0_5, %c0_6] : memref<1x32xf32, #tpu.memory_space<vmem>>, vector<1x32xf32>
    %13 = vector.broadcast %12 : vector<1x32xf32> to vector<16x32xf32>
    %14 = arith.mulf %13, %11 : vector<16x32xf32>
    %c0_7 = arith.constant 0 : index
    %c0_8 = arith.constant 0 : index
    %15 = vector.load %arg3[%c0_7, %c0_8] : memref<16x32xf32, #tpu.memory_space<vmem>>, vector<16x32xf32>
    tpu.vector_store %arg3[%c0_7, %c0_8], %14 {strides = array<i32>} : memref<16x32xf32, #tpu.memory_space<vmem>>, vector<16x32xf32>,
    return
  }
  func.func @transform_0(%arg0: i32) -> (i32, i32) {
    %c0_i32 = arith.constant 0 : i32
    %c0_i32_0 = arith.constant 0 : i32
    return %arg0, %c0_i32 : i32, i32
  }
  func.func @transform_1(%arg0: i32) -> (i32, i32) {
    %c0_i32 = arith.constant 0 : i32
    %c0_i32_0 = arith.constant 0 : i32
    %c0_i32_1 = arith.constant 0 : i32
    return %c0_i32, %c0_i32_0 : i32, i32
  }
  func.func @transform_2(%arg0: i32) -> (i32, i32) {
    %c0_i32 = arith.constant 0 : i32
    %c0_i32_0 = arith.constant 0 : i32
    return %arg0, %c0_i32 : i32, i32
  }
}

</mosaic_0001>

<llo_original>
// kernel: tpu_custom_call.1
$region0: #{tpu_custom_call.1}
  #allocation0 [shape = 'u32[]', space=smem, size = 0x4, offset = 0x4, fixed_abs, tag = 'smem constant byte address 0x4 - core index']
  #allocation1 [shape = 'u32[72,128]{1,0:T(1,128)}', space=vmem, size = 0x9000, scoped, tag = 'internal scratch']
  %s0 = inlined_call_operand.hbm [shape: f32[16,32], index: 0, kind: input, shape index: {}]
  %s1 = inlined_call_operand.hbm [shape: f32[1,32], index: 1, kind: input, shape index: {}]
  %s2 = inlined_call_operand.hbm [shape: f32[16,32], index: 2, kind: output, shape index: {}]
  %s3 = sld [smem:[#allocation0]]
  $region26: #{tpu_custom_call.1} parent=0
    _
  %s5 = ssub.s32 1, %s3
  %s6 = scalar_select 0, %s5, %s3
  $region1: #{tpu_custom_call.1} parent=0
    #allocation2 [shape = 'u8[8192]{0}', space=vmem, size = 0x2000, scoped, tag = 'input window, operand 0, single buffered']
    #allocation3 [shape = 's32[1]{0}', space=sflag, size = 0x4, scoped, tag = 'scoped memory for tpu_custom_call.1']
    #allocation4 [shape = 's32[1]{0}', space=sflag, size = 0x4, scoped, tag = 'scoped memory for tpu_custom_call.1']
    #allocation5 [shape = 'u8[512]{0}', space=vmem, size = 0x400, scoped, tag = 'input window, operand 1, single buffered']
    #allocation6 [shape = 's32[1]{0}', space=sflag, size = 0x4, scoped, tag = 'scoped memory for tpu_custom_call.1']
    #allocation7 [shape = 'u8[8192]{0}', space=vmem, size = 0x2000, scoped, tag = 'output window, operand 0, single buffered']
    %7 = vsyncpa [#allocation3], 0
    %8 = vsyncpa [#allocation6], 0
    %9 = vsyncpa [#allocation4], 0
    // Predicated region
    $region2: #{tpu_custom_call.1} parent=1 // pred_check
      _
    $region3: #{tpu_custom_call.1} parent=1 // pred_check_branch
      %11 = sbr.rel (0) target = $region5
    $region4: #{tpu_custom_call.1} parent=1 // pred_region
      %13 = vsyncadd [#allocation3], 0
      %s14 = sshll.u32 %s0, 4
      %s15 = int_to_ptr.hbm [resolvable:$true] %s14
      %s16 = sshll.u32 [#allocation2], 4
      %s17 = int_to_ptr.vmem [resolvable:$true] %s16
      %22 = dma.hbm_to_vmem [thread:$0]  %s15, 256, %s17, [#allocation3], 128, 128, 8
    $region5: #{tpu_custom_call.1} parent=1 // pred_fallthru
      _
    // Predicated region
    $region6: #{tpu_custom_call.1} parent=1 // pred_check
      _
    $region7: #{tpu_custom_call.1} parent=1 // pred_check_branch
      %24 = sbr.rel (0) target = $region9
    $region8: #{tpu_custom_call.1} parent=1 // pred_region
      %26 = vsyncadd [#allocation6], 0
      %s28 = sshll.u32 %s1, 4
      %s29 = int_to_ptr.hbm [resolvable:$true] %s28
      %s30 = sshll.u32 [#allocation5], 4
      %s31 = int_to_ptr.vmem [resolvable:$true] %s30
      %33 = dma.hbm_to_vmem [thread:$0]  %s29, 16, %s31, [#allocation6]
    $region9: #{tpu_custom_call.1} parent=1 // pred_fallthru
      _
    // Predicated region
    $region10: #{tpu_custom_call.1} parent=1 // pred_check
      _
    $region11: #{tpu_custom_call.1} parent=1 // pred_check_branch
      %35 = sbr.rel (0) target = $region13
    $region12: #{tpu_custom_call.1} parent=1 // pred_region
      %37 = dma.done [#allocation3], 256
    $region13: #{tpu_custom_call.1} parent=1 // pred_fallthru
      _
    // Predicated region
    $region14: #{tpu_custom_call.1} parent=1 // pred_check
      _
    $region15: #{tpu_custom_call.1} parent=1 // pred_check_branch
      %39 = sbr.rel (0) target = $region17
    $region16: #{tpu_custom_call.1} parent=1 // pred_region
      %41 = dma.done [#allocation6], 16
    $region17: #{tpu_custom_call.1} parent=1 // pred_fallthru
      _
    %v42 = vld [vmem:[#allocation2] sm:$0xff]
    %v43 = vld [vmem:[#allocation2 + $0x8] sm:$0xff]
    %v44 = vmul.f32 %v42, %v42
    %v45 = vmul.f32 %v43, %v43
    %vm46 = vcmask 261120
    %v47 = vsel %vm46, %v44, 0.0
    %48 = vadd.xlane.f32.xlu0 %v47
    %v49 = vpop.xlane.xlu0 %48
    %v50 = vsel %vm46, %v45, 0.0
    %51 = vadd.xlane.f32.xlu0 %v50
    %v52 = vpop.xlane.xlu0 %51
    %v53 = vrcp.pop 32.0
    %v54 = vmul.f32 32.0, %v53
    %v55 = vsub.f32 1.0, %v54
    %v56 = vmul.f32 %v53, %v55
    %v57 = vadd.f32 %v53, %v56
    %vm58 = vweird.f32 %v53
    %v59 = vsel %vm58, %v53, %v57
    %v60 = vmul.f32 %v49, %v59
    %v61 = vmul.f32 %v52, %v59
    %v62 = vadd.f32 %v60, 1e-06
    %v63 = vadd.f32 %v61, 1e-06
    %v64 = vrsqrt.pop %v62
    %v65 = vmul.f32 %v64, %v62
    %v66 = vmul.f32 %v65, %v64
    %v67 = vmul.f32 0.5, %v66
    %v68 = vsub.f32 1.5, %v67
    %v69 = vmul.f32 %v64, %v68
    %vm70 = vweird.f32 %v62
    %vm71 = vweird.f32 %v64
    %vm72 = vmor %vm70, %vm71
    %v73 = vsel %vm72, %v64, %v69
    %v74 = vrsqrt.pop %v63
    %v75 = vmul.f32 %v74, %v63
    %v76 = vmul.f32 %v75, %v74
    %v77 = vmul.f32 0.5, %v76
    %v78 = vsub.f32 1.5, %v77
    %v79 = vmul.f32 %v74, %v78
    %vm80 = vweird.f32 %v63
    %vm81 = vweird.f32 %v74
    %vm82 = vmor %vm80, %vm81
    %v83 = vsel %vm82, %v74, %v79
    %v84 = vmul.f32 %v42, %v73
    %v85 = vmul.f32 %v43, %v83
    %v86 = vld [vmem:[#allocation5] sm:$0x1]
    %v88 = vperm.slane %v86, 0
    %v90 = vmul.f32 %v88, %v84
    %v91 = vmul.f32 %v88, %v85
    %92 = vst.msk [vmem:[#allocation7] sm:$0xff] %vm46, %v90
    %93 = vst.msk [vmem:[#allocation7 + $0x8] sm:$0xff] %vm46, %v91
    // Predicated region
    $region18: #{tpu_custom_call.1} parent=1 // pred_check
      _
    $region19: #{tpu_custom_call.1} parent=1 // pred_check_branch
      %95 = sbr.rel (0) target = $region21
    $region20: #{tpu_custom_call.1} parent=1 // pred_region
      %97 = vsyncadd [#allocation4], 0
      %s98 = sshll.u32 [#allocation7], 4
      %s99 = int_to_ptr.vmem [resolvable:$true] %s98
      %s100 = sshll.u32 %s2, 4
      %s101 = int_to_ptr.hbm [resolvable:$true] %s100
      %106 = dma.vmem_to_hbm [thread:$0]  %s99, 256, %s101, [#allocation4], 128, 128, 8
    $region21: #{tpu_custom_call.1} parent=1 // pred_fallthru
      _
    // Predicated region
    $region22: #{tpu_custom_call.1} parent=1 // pred_check
      _
    $region23: #{tpu_custom_call.1} parent=1 // pred_check_branch
      %108 = sbr.rel (0) target = $region25
    $region24: #{tpu_custom_call.1} parent=1 // pred_region
      %110 = dma.done [#allocation4], 256
    $region25: #{tpu_custom_call.1} parent=1 // pred_fallthru
      _
    %111 = vsyncpa [#allocation3], 1
    %112 = vsyncpa [#allocation6], 1
    %113 = vsyncpa [#allocation4], 1

</llo_original>
